<compile_context>
chip_gen: v7x
topology: tpu7x:2x2x1
jax: 0.10.0
libtpu: 0.0.40
codegen_flags: <defaults>
</compile_context>

<pallas_src>
import jax
import jax.numpy as jnp
from jax.experimental import pallas as pl
from jax.experimental.pallas import tpu as pltpu

FEATURE_DIM = 64
EPS = 1e-5              # PyTorch nn.LayerNorm default eps
NEG_BIG = -1e30         # softmax mask value for padded logit lanes
MAX_TILE_B = 2048       # batch tile upper bound (fits VMEM on v5e/v6e/v7x)


def _round_up(x, m):
    return (x + m - 1) // m * m


def _layernorm(x, gamma, beta):
    mean = jnp.mean(x, axis=-1, keepdims=True)
    var = jnp.mean((x - mean) ** 2, axis=-1, keepdims=True)
    xhat = (x - mean) * jax.lax.rsqrt(var + EPS)
    return xhat * gamma + beta


def fusion_kernel(f0_ref, f1_ref, f2_ref, w3_ref, w2_ref, p_ref, out_ref):
    F = FEATURE_DIM
    x0 = f0_ref[...]
    x1 = f1_ref[...]
    x2 = f2_ref[...]

    # ---- One K=64, N=256 matmul per modality.
    # Columns: [0:F)   attention linear-1   (wa1 rows of x_i)
    #          [F:2F)  gate linear-1        (wg1 rows of x_i)
    #          [2F:3F) fusion linear-1      (wf1 rows of x_i)
    #          [3F:4F) zero padding
    big = (
        jnp.dot(x0, w3_ref[0 * F:1 * F, :], preferred_element_type=jnp.float32)
        + jnp.dot(x1, w3_ref[1 * F:2 * F, :], preferred_element_type=jnp.float32)
        + jnp.dot(x2, w3_ref[2 * F:3 * F, :], preferred_element_type=jnp.float32)
    )  # [B, 256]

    # ---- attention + gate branches (first 128 lanes of `big`).
    hg = big[:, 0:2 * F] + p_ref[0:1, :]                         # [B, 128]
    h = jnp.tanh(_layernorm(hg[:, 0:F], p_ref[1:2, 0:F], p_ref[2:3, 0:F]))
    g = jax.nn.sigmoid(_layernorm(hg[:, F:2 * F], p_ref[1:2, F:2 * F], p_ref[2:3, F:2 * F]))

    # ---- attention logits: real columns live at lanes 64..66; all other lanes
    # carry -1e30 bias (exp underflows to exactly 0), so the 128-lane softmax is
    # exactly the 3-way softmax and the result is already positioned for the
    # merged output slab.
    logits = (jnp.dot(h, w2_ref[1 * F:2 * F, :], preferred_element_type=jnp.float32)
              + p_ref[3:4, :])                                   # [B, 128]
    m = jnp.max(logits, axis=-1, keepdims=True)
    e = jnp.exp(logits - m)
    inv = pl.reciprocal(jnp.sum(e, axis=-1, keepdims=True), approx=False)
    aw = e * inv                                                 # [B, 128]; lanes != 64..66 are 0

    # ---- attended = sum_i aw_i * x_i (one lane-broadcast per modality).
    attended = aw[:, F:F + 1] * x0 + aw[:, F + 1:F + 2] * x1 + aw[:, F + 2:F + 3] * x2
    gated = attended * g

    # ---- fusion MLP. The x_i contributions to the first linear are already in
    # big[:, 2F:4F]; only the `gated` contribution is left to compute.
    fh = (jnp.dot(gated, w2_ref[0 * F:1 * F, :], preferred_element_type=jnp.float32)
          + big[:, 2 * F:4 * F]
          + p_ref[4:5, :])[:, 0:F]
    fh = jnp.maximum(_layernorm(fh, p_ref[5:6, 0:F], p_ref[6:7, 0:F]), 0.0)
    # TODO(synk): training-mode Dropout(0.1) not implemented; eval-mode identity used.
    fh = (jnp.dot(fh, w2_ref[2 * F:3 * F, :], preferred_element_type=jnp.float32)
          + p_ref[7:8, :])[:, 0:F]
    fh = _layernorm(fh, p_ref[5:6, F:2 * F], p_ref[6:7, F:2 * F])
    fused = fh + attended                                        # [B, F]

    # ---- merged output: lanes 0:64 = fused, lanes 64:67 = attention weights,
    # lanes 67:128 = 0 (aw's padded lanes are exactly 0). Single lane-dense store.
    out_ref[...] = jnp.concatenate([fused, jnp.zeros_like(fused)], axis=-1) + aw


def pack_params(p, F=FEATURE_DIM):
    """Pack the 18 PyTorch-style parameter arrays into 3 VMEM-friendly slabs."""
    (wa1, ba1, ga1, gb_a1, wa2, ba2,
     wg1, bg1, gg1, gb_g1,
     wf1, bf1, gf1, gb_f1,
     wf2, bf2, gf2, gb_f2) = p
    f32 = jnp.float32

    # W3 [3F, 256]: per-modality blocks [wa1_i | wg1_i | wf1_{x_i} | 0].
    # Fusion-linear-1 input order is [gated, x0, x1, x2] -> x_i uses wf1 rows (i+1)*F:(i+2)*F.
    blocks = []
    for i in range(3):
        blk = jnp.zeros((F, 256), f32)
        blk = blk.at[:, 0:F].set(jnp.asarray(wa1[i * F:(i + 1) * F, :], f32))
        blk = blk.at[:, F:2 * F].set(jnp.asarray(wg1[i * F:(i + 1) * F, :], f32))
        blk = blk.at[:, 2 * F:3 * F].set(jnp.asarray(wf1[(i + 1) * F:(i + 2) * F, :], f32))
        blocks.append(blk)
    W3 = jnp.concatenate(blocks, axis=0)                             # [3F, 256]

    # W2 [3F, 128]: [wf1_gated ; wa2 (at cols 64..66) ; wf2], zero-padded to 128 cols.
    w_f1g = jnp.zeros((F, 128), f32).at[:, 0:F].set(jnp.asarray(wf1[0:F, :], f32))
    w_a2 = jnp.zeros((F, 128), f32).at[:, F:F + 3].set(jnp.asarray(wa2, f32))
    w_f2 = jnp.zeros((F, 128), f32).at[:, 0:F].set(jnp.asarray(wf2, f32))
    W2 = jnp.concatenate([w_f1g, w_a2, w_f2], axis=0)                # [3F, 128]

    # P [8, 128]: bias / LayerNorm slab (exactly one f32 vreg).
    def row(*pieces, fill=0.0, offset=0):
        r = jnp.full((1, 128), fill, f32)
        off = offset
        for x in pieces:
            x = jnp.asarray(x, f32).reshape(1, -1)
            r = r.at[:, off:off + x.shape[1]].set(x)
            off += x.shape[1]
        return r

    P = jnp.concatenate([
        row(ba1, bg1),                        # row 0: attn|gate linear-1 bias
        row(ga1, gg1),                        # row 1: LN gammas (attn | gate)
        row(gb_a1, gb_g1),                    # row 2: LN betas  (attn | gate)
        row(ba2, fill=NEG_BIG, offset=F),     # row 3: logits bias at cols 64..66, -1e30 elsewhere
        row(bf1),                             # row 4: fusion linear-1 bias
        row(gf1, gf2),                        # row 5: fusion LN gammas (1 | 2)
        row(gb_f1, gb_f2),                    # row 6: fusion LN betas  (1 | 2)
        row(bf2),                             # row 7: fusion linear-2 bias
    ], axis=0)
    return W3, W2, P


def modality_fusion(features, packed, *, tile_b=MAX_TILE_B):
    """features: list of 3 [B, F] arrays; packed: (W3 [3F,256], W2 [3F,128], P [8,128])."""
    W3, W2, P = packed
    B, F = features[0].shape
    assert F == FEATURE_DIM

    # Batch tile: as large as possible (amortize ~0.35us/grid-step), but capped
    # at ceil(B/2) (rounded to 8) so the grid keeps >= 2 parallel steps and both
    # v7x TensorCores get work. Ragged last tile is fine: all ops are
    # row-independent and out-of-bounds writes are dropped.
    tb = min(tile_b, _round_up(pl.cdiv(B, 2), 8))
    if tb >= B:
        tb = B
    nb = pl.cdiv(B, tb)

    grid_spec = pltpu.PrefetchScalarGridSpec(
        num_scalar_prefetch=0,
        grid=(nb,),
        in_specs=[
            pl.BlockSpec((tb, F), lambda i: (i, 0)),
            pl.BlockSpec((tb, F), lambda i: (i, 0)),
            pl.BlockSpec((tb, F), lambda i: (i, 0)),
            pl.BlockSpec((3 * F, 256), lambda i: (0, 0)),   # per-modality weight slab, resident
            pl.BlockSpec((3 * F, 128), lambda i: (0, 0)),   # gated/logits/wf2 weight slab, resident
            pl.BlockSpec((8, 128), lambda i: (0, 0)),       # bias/LayerNorm slab, resident
        ],
        out_specs=pl.BlockSpec((tb, 128), lambda i: (i, 0)),  # merged fused|attn slab
    )

    # Cost estimate (scheduling hint): count lane-padded input reads (64-lane f32
    # rows occupy 128 lanes in tiled layout) and the merged 128-lane output.
    flops = int(B) * (2 * F * (3 * 256 + 3 * 128) + 32 * F)
    transcendentals = int(B) * (2 * F + 128 + 8)
    bytes_accessed = (4 * int(B) * 128) * 4 + (3 * F * 256 + 3 * F * 128 + 8 * 128) * 4

    out = pl.pallas_call(
        fusion_kernel,
        out_shape=jax.ShapeDtypeStruct((B, 128), jnp.float32),
        grid_spec=grid_spec,
        compiler_params=pltpu.CompilerParams(
            dimension_semantics=("parallel",),
            vmem_limit_bytes=32 * 1024 * 1024,
        ),
        cost_estimate=pl.CostEstimate(
            flops=flops, transcendentals=transcendentals, bytes_accessed=bytes_accessed),
    )(*features, W3, W2, P)

    fused = out[:, :F]
    attn = out[:, F:F + 3]
    return fused, attn


def init_params(key, F=FEATURE_DIM):
    """Deterministic synthetic parameters; PyTorch-like small init. Biases as [1, N]."""
    ks = jax.random.split(key, 8)

    def lin(k, fin, fout):
        w = jax.random.normal(k, (fin, fout), jnp.float32) * (1.0 / jnp.sqrt(fin))
        b = jnp.zeros((1, fout), jnp.float32)
        return w, b

    def ln(n):
        return jnp.ones((1, n), jnp.float32), jnp.zeros((1, n), jnp.float32)

    wa1, ba1 = lin(ks[0], 3 * F, F)
    ga1, gb_a1 = ln(F)
    wa2, ba2 = lin(ks[1], F, 3)
    wg1, bg1 = lin(ks[2], 3 * F, F)
    gg1, gb_g1 = ln(F)
    wf1, bf1 = lin(ks[3], 4 * F, F)
    gf1, gb_f1 = ln(F)
    wf2, bf2 = lin(ks[4], F, F)
    gf2, gb_f2 = ln(F)

    return [
        wa1, ba1, ga1, gb_a1, wa2, ba2,
        wg1, bg1, gg1, gb_g1,
        wf1, bf1, gf1, gb_f1,
        wf2, bf2, gf2, gb_f2,
    ]


def reference_forward(features, p):
    """Pure-JAX reference matching the PyTorch forward (eval mode)."""
    (wa1, ba1, ga1, gb_a1, wa2, ba2,
     wg1, bg1, gg1, gb_g1,
     wf1, bf1, gf1, gb_f1,
     wf2, bf2, gf2, gb_f2) = p
    x0, x1, x2 = features
    concat = jnp.concatenate([x0, x1, x2], axis=-1)

    def lnorm(x, g, b):
        mu = jnp.mean(x, axis=-1, keepdims=True)
        v = jnp.mean((x - mu) ** 2, axis=-1, keepdims=True)
        return (x - mu) / jnp.sqrt(v + EPS) * g + b

    h = jnp.tanh(lnorm(concat @ wa1 + ba1, ga1, gb_a1))
    aw = jax.nn.softmax(h @ wa2 + ba2, axis=-1)
    g = jax.nn.sigmoid(lnorm(concat @ wg1 + bg1, gg1, gb_g1))
    stacked = jnp.stack([x0, x1, x2], axis=1)
    attended = jnp.sum(stacked * aw[..., None], axis=1)
    gated = attended * g
    fcat = jnp.concatenate([gated, x0, x1, x2], axis=-1)
    fh = jax.nn.relu(lnorm(fcat @ wf1 + bf1, gf1, gb_f1))
    fh = lnorm(fh @ wf2 + bf2, gf2, gb_f2)
    return fh + attended, aw


if __name__ == "__main__":
    B, F = 8, FEATURE_DIM
    key = jax.random.PRNGKey(0)
    k_in, k_par = jax.random.split(key)
    kf = jax.random.split(k_in, 3)
    features = [jax.random.normal(kf[i], (B, F), jnp.float32) for i in range(3)]
    params = init_params(k_par, F)
    packed = pack_params(params, F)

    fused, attn = modality_fusion(features, packed)
    fused = jax.block_until_ready(fused)
    attn = jax.block_until_ready(attn)

    ref_fused, ref_attn = reference_forward(features, params)
    assert fused.shape == (B, F) and attn.shape == (B, 3)
    assert jnp.allclose(fused, ref_fused, rtol=1e-4, atol=1e-4)
    assert jnp.allclose(attn, ref_attn, rtol=1e-4, atol=1e-4)

    print("KERNEL_OK")
</pallas_src>

<mosaic_0001>
module attributes {stable_mosaic.version = 11 : i64} {
  func.func @fusion_kernel(%arg0: i32, %arg1: memref<8x64xf32, #tpu.memory_space<vmem>>, %arg2: memref<8x64xf32, #tpu.memory_space<vmem>>, %arg3: memref<8x64xf32, #tpu.memory_space<vmem>>, %arg4: memref<192x256xf32, #tpu.memory_space<vmem>>, %arg5: memref<192x128xf32, #tpu.memory_space<vmem>>, %arg6: memref<8x128xf32, #tpu.memory_space<vmem>>, %arg7: memref<8x128xf32, #tpu.memory_space<vmem>>) attributes {dimension_semantics = [#tpu.dimension_semantics<parallel>], iteration_bounds = array<i64: 1>, scalar_prefetch = 0 : i64, scratch_operands = 0 : i64, tpu.core_type = #tpu.core_type<tc>, window_params = [{transform_indices = @transform_0, window_bounds = array<i64: 8, 64>}, {transform_indices = @transform_1, window_bounds = array<i64: 8, 64>}, {transform_indices = @transform_2, window_bounds = array<i64: 8, 64>}, {pipeline_mode = #tpu.pipeline_mode<synchronous>, transform_indices = @transform_3, window_bounds = array<i64: 192, 256>}, {pipeline_mode = #tpu.pipeline_mode<synchronous>, transform_indices = @transform_4, window_bounds = array<i64: 192, 128>}, {pipeline_mode = #tpu.pipeline_mode<synchronous>, transform_indices = @transform_5, window_bounds = array<i64: 8, 128>}, {transform_indices = @transform_6, window_bounds = array<i64: 8, 128>}]} {
    %c0 = arith.constant 0 : index
    %c0_0 = arith.constant 0 : index
    %0 = vector.load %arg1[%c0, %c0_0] : memref<8x64xf32, #tpu.memory_space<vmem>>, vector<8x64xf32>
    %c0_1 = arith.constant 0 : index
    %c0_2 = arith.constant 0 : index
    %1 = vector.load %arg2[%c0_1, %c0_2] : memref<8x64xf32, #tpu.memory_space<vmem>>, vector<8x64xf32>
    %c0_3 = arith.constant 0 : index
    %c0_4 = arith.constant 0 : index
    %2 = vector.load %arg3[%c0_3, %c0_4] : memref<8x64xf32, #tpu.memory_space<vmem>>, vector<8x64xf32>
    %c0_5 = arith.constant 0 : index
    %c0_6 = arith.constant 0 : index
    %3 = vector.load %arg4[%c0_5, %c0_6] : memref<192x256xf32, #tpu.memory_space<vmem>>, vector<64x256xf32>
    %cst = arith.constant dense<0.000000e+00> : vector<8x256xf32>
    %4 = tpu.matmul %0, %3, %cst {dimension_numbers = #tpu.dot_dimension_numbers<[1], [0], [0], [1], [0, 0, 1, 1], [], []>} : vector<8x64xf32>, vector<64x256xf32>, vector<8x256xf32> -> vector<8x256xf32>
    %c64 = arith.constant 64 : index
    %c0_7 = arith.constant 0 : index
    %5 = vector.load %arg4[%c64, %c0_7] : memref<192x256xf32, #tpu.memory_space<vmem>>, vector<64x256xf32>
    %cst_8 = arith.constant dense<0.000000e+00> : vector<8x256xf32>
    %6 = tpu.matmul %1, %5, %cst_8 {dimension_numbers = #tpu.dot_dimension_numbers<[1], [0], [0], [1], [0, 0, 1, 1], [], []>} : vector<8x64xf32>, vector<64x256xf32>, vector<8x256xf32> -> vector<8x256xf32>
    %7 = arith.addf %4, %6 : vector<8x256xf32>
    %c128 = arith.constant 128 : index
    %c0_9 = arith.constant 0 : index
    %8 = vector.load %arg4[%c128, %c0_9] : memref<192x256xf32, #tpu.memory_space<vmem>>, vector<64x256xf32>
    %cst_10 = arith.constant dense<0.000000e+00> : vector<8x256xf32>
    %9 = tpu.matmul %2, %8, %cst_10 {dimension_numbers = #tpu.dot_dimension_numbers<[1], [0], [0], [1], [0, 0, 1, 1], [], []>} : vector<8x64xf32>, vector<64x256xf32>, vector<8x256xf32> -> vector<8x256xf32>
    %10 = arith.addf %7, %9 : vector<8x256xf32>
    %11 = vector.extract_strided_slice %10 {offsets = [0, 0], sizes = [8, 128], strides = [1, 1]} : vector<8x256xf32> to vector<8x128xf32>
    %c0_11 = arith.constant 0 : index
    %c0_12 = arith.constant 0 : index
    %12 = vector.load %arg6[%c0_11, %c0_12] : memref<8x128xf32, #tpu.memory_space<vmem>>, vector<1x128xf32>
    %13 = vector.broadcast %12 : vector<1x128xf32> to vector<8x128xf32>
    %14 = arith.addf %11, %13 : vector<8x128xf32>
    %15 = vector.extract_strided_slice %14 {offsets = [0, 0], sizes = [8, 64], strides = [1, 1]} : vector<8x128xf32> to vector<8x64xf32>
    %c1 = arith.constant 1 : index
    %c0_13 = arith.constant 0 : index
    %16 = vector.load %arg6[%c1, %c0_13] : memref<8x128xf32, #tpu.memory_space<vmem>>, vector<1x64xf32>
    %c2 = arith.constant 2 : index
    %c0_14 = arith.constant 0 : index
    %17 = vector.load %arg6[%c2, %c0_14] : memref<8x128xf32, #tpu.memory_space<vmem>>, vector<1x64xf32>
    %cst_15 = arith.constant dense<0.000000e+00> : vector<8xf32>
    %18 = vector.multi_reduction <add>, %15, %cst_15 [1] : vector<8x64xf32> to vector<8xf32>
    %19 = vector.shape_cast %18 : vector<8xf32> to vector<8x1xf32>
    %cst_16 = arith.constant 6.400000e+01 : f32
    %20 = vector.broadcast %cst_16 : f32 to vector<8x1xf32>
    %21 = arith.divf %19, %20 : vector<8x1xf32>
    %22 = vector.broadcast %21 : vector<8x1xf32> to vector<8x64xf32>
    %23 = arith.subf %15, %22 : vector<8x64xf32>
    %24 = arith.mulf %23, %23 : vector<8x64xf32>
    %cst_17 = arith.constant dense<0.000000e+00> : vector<8xf32>
    %25 = vector.multi_reduction <add>, %24, %cst_17 [1] : vector<8x64xf32> to vector<8xf32>
    %26 = vector.shape_cast %25 : vector<8xf32> to vector<8x1xf32>
    %cst_18 = arith.constant 6.400000e+01 : f32
    %27 = vector.broadcast %cst_18 : f32 to vector<8x1xf32>
    %28 = arith.divf %26, %27 : vector<8x1xf32>
    %29 = vector.broadcast %21 : vector<8x1xf32> to vector<8x64xf32>
    %30 = arith.subf %15, %29 : vector<8x64xf32>
    %cst_19 = arith.constant 9.99999974E-6 : f32
    %31 = vector.broadcast %cst_19 : f32 to vector<8x1xf32>
    %32 = arith.addf %28, %31 : vector<8x1xf32>
    %33 = math.rsqrt %32 : vector<8x1xf32>
    %34 = vector.broadcast %33 : vector<8x1xf32> to vector<8x64xf32>
    %35 = arith.mulf %30, %34 : vector<8x64xf32>
    %36 = vector.broadcast %16 : vector<1x64xf32> to vector<8x64xf32>
    %37 = arith.mulf %35, %36 : vector<8x64xf32>
    %38 = vector.broadcast %17 : vector<1x64xf32> to vector<8x64xf32>
    %39 = arith.addf %37, %38 : vector<8x64xf32>
    %40 = math.tanh %39 : vector<8x64xf32>
    %41 = vector.extract_strided_slice %14 {offsets = [0, 64], sizes = [8, 64], strides = [1, 1]} : vector<8x128xf32> to vector<8x64xf32>
    %c1_20 = arith.constant 1 : index
    %c64_21 = arith.constant 64 : index
    %42 = vector.load %arg6[%c1_20, %c64_21] : memref<8x128xf32, #tpu.memory_space<vmem>>, vector<1x64xf32>
    %c2_22 = arith.constant 2 : index
    %c64_23 = arith.constant 64 : index
    %43 = vector.load %arg6[%c2_22, %c64_23] : memref<8x128xf32, #tpu.memory_space<vmem>>, vector<1x64xf32>
    %cst_24 = arith.constant dense<0.000000e+00> : vector<8xf32>
    %44 = vector.multi_reduction <add>, %41, %cst_24 [1] : vector<8x64xf32> to vector<8xf32>
    %45 = vector.shape_cast %44 : vector<8xf32> to vector<8x1xf32>
    %cst_25 = arith.constant 6.400000e+01 : f32
    %46 = vector.broadcast %cst_25 : f32 to vector<8x1xf32>
    %47 = arith.divf %45, %46 : vector<8x1xf32>
    %48 = vector.broadcast %47 : vector<8x1xf32> to vector<8x64xf32>
    %49 = arith.subf %41, %48 : vector<8x64xf32>
    %50 = arith.mulf %49, %49 : vector<8x64xf32>
    %cst_26 = arith.constant dense<0.000000e+00> : vector<8xf32>
    %51 = vector.multi_reduction <add>, %50, %cst_26 [1] : vector<8x64xf32> to vector<8xf32>
    %52 = vector.shape_cast %51 : vector<8xf32> to vector<8x1xf32>
    %cst_27 = arith.constant 6.400000e+01 : f32
    %53 = vector.broadcast %cst_27 : f32 to vector<8x1xf32>
    %54 = arith.divf %52, %53 : vector<8x1xf32>
    %55 = vector.broadcast %47 : vector<8x1xf32> to vector<8x64xf32>
    %56 = arith.subf %41, %55 : vector<8x64xf32>
    %cst_28 = arith.constant 9.99999974E-6 : f32
    %57 = vector.broadcast %cst_28 : f32 to vector<8x1xf32>
    %58 = arith.addf %54, %57 : vector<8x1xf32>
    %59 = math.rsqrt %58 : vector<8x1xf32>
    %60 = vector.broadcast %59 : vector<8x1xf32> to vector<8x64xf32>
    %61 = arith.mulf %56, %60 : vector<8x64xf32>
    %62 = vector.broadcast %42 : vector<1x64xf32> to vector<8x64xf32>
    %63 = arith.mulf %61, %62 : vector<8x64xf32>
    %64 = vector.broadcast %43 : vector<1x64xf32> to vector<8x64xf32>
    %65 = arith.addf %63, %64 : vector<8x64xf32>
    %66 = arith.negf %65 : vector<8x64xf32>
    %67 = math.exp %66 : vector<8x64xf32>
    %cst_29 = arith.constant 1.000000e+00 : f32
    %68 = vector.broadcast %cst_29 : f32 to vector<8x64xf32>
    %69 = arith.addf %68, %67 : vector<8x64xf32>
    %70 = arith.divf %68, %69 : vector<8x64xf32>
    %c64_30 = arith.constant 64 : index
    %c0_31 = arith.constant 0 : index
    %71 = vector.load %arg5[%c64_30, %c0_31] : memref<192x128xf32, #tpu.memory_space<vmem>>, vector<64x128xf32>
    %cst_32 = arith.constant dense<0.000000e+00> : vector<8x128xf32>
    %72 = tpu.matmul %40, %71, %cst_32 {dimension_numbers = #tpu.dot_dimension_numbers<[1], [0], [0], [1], [0, 0, 1, 1], [], []>} : vector<8x64xf32>, vector<64x128xf32>, vector<8x128xf32> -> vector<8x128xf32>
    %c3 = arith.constant 3 : index
    %c0_33 = arith.constant 0 : index
    %73 = vector.load %arg6[%c3, %c0_33] : memref<8x128xf32, #tpu.memory_space<vmem>>, vector<1x128xf32>
    %74 = vector.broadcast %73 : vector<1x128xf32> to vector<8x128xf32>
    %75 = arith.addf %72, %74 : vector<8x128xf32>
    %cst_34 = arith.constant dense<0xFF800000> : vector<8xf32>
    %76 = vector.multi_reduction <maximumf>, %75, %cst_34 [1] : vector<8x128xf32> to vector<8xf32>
    %77 = vector.shape_cast %76 : vector<8xf32> to vector<8x1xf32>
    %78 = vector.broadcast %77 : vector<8x1xf32> to vector<8x128xf32>
    %79 = arith.subf %75, %78 : vector<8x128xf32>
    %80 = math.exp %79 : vector<8x128xf32>
    %cst_35 = arith.constant dense<0.000000e+00> : vector<8xf32>
    %81 = vector.multi_reduction <add>, %80, %cst_35 [1] : vector<8x128xf32> to vector<8xf32>
    %82 = vector.shape_cast %81 : vector<8xf32> to vector<8x1xf32>
    %83 = tpu.reciprocal %82 : vector<8x1xf32> -> vector<8x1xf32>
    %84 = vector.broadcast %83 : vector<8x1xf32> to vector<8x128xf32>
    %85 = arith.mulf %80, %84 : vector<8x128xf32>
    %86 = vector.extract_strided_slice %85 {offsets = [0, 64], sizes = [8, 1], strides = [1, 1]} : vector<8x128xf32> to vector<8x1xf32>
    %87 = vector.broadcast %86 : vector<8x1xf32> to vector<8x64xf32>
    %88 = arith.mulf %87, %0 : vector<8x64xf32>
    %89 = vector.extract_strided_slice %85 {offsets = [0, 65], sizes = [8, 1], strides = [1, 1]} : vector<8x128xf32> to vector<8x1xf32>
    %90 = vector.broadcast %89 : vector<8x1xf32> to vector<8x64xf32>
    %91 = arith.mulf %90, %1 : vector<8x64xf32>
    %92 = arith.addf %88, %91 : vector<8x64xf32>
    %93 = vector.extract_strided_slice %85 {offsets = [0, 66], sizes = [8, 1], strides = [1, 1]} : vector<8x128xf32> to vector<8x1xf32>
    %94 = vector.broadcast %93 : vector<8x1xf32> to vector<8x64xf32>
    %95 = arith.mulf %94, %2 : vector<8x64xf32>
    %96 = arith.addf %92, %95 : vector<8x64xf32>
    %97 = arith.mulf %96, %70 : vector<8x64xf32>
    %c0_36 = arith.constant 0 : index
    %c0_37 = arith.constant 0 : index
    %98 = vector.load %arg5[%c0_36, %c0_37] : memref<192x128xf32, #tpu.memory_space<vmem>>, vector<64x128xf32>
    %cst_38 = arith.constant dense<0.000000e+00> : vector<8x128xf32>
    %99 = tpu.matmul %97, %98, %cst_38 {dimension_numbers = #tpu.dot_dimension_numbers<[1], [0], [0], [1], [0, 0, 1, 1], [], []>} : vector<8x64xf32>, vector<64x128xf32>, vector<8x128xf32> -> vector<8x128xf32>
    %100 = vector.extract_strided_slice %10 {offsets = [0, 128], sizes = [8, 128], strides = [1, 1]} : vector<8x256xf32> to vector<8x128xf32>
    %101 = arith.addf %99, %100 : vector<8x128xf32>
    %c4 = arith.constant 4 : index
    %c0_39 = arith.constant 0 : index
    %102 = vector.load %arg6[%c4, %c0_39] : memref<8x128xf32, #tpu.memory_space<vmem>>, vector<1x128xf32>
    %103 = vector.broadcast %102 : vector<1x128xf32> to vector<8x128xf32>
    %104 = arith.addf %101, %103 : vector<8x128xf32>
    %105 = vector.extract_strided_slice %104 {offsets = [0, 0], sizes = [8, 64], strides = [1, 1]} : vector<8x128xf32> to vector<8x64xf32>
    %c5 = arith.constant 5 : index
    %c0_40 = arith.constant 0 : index
    %106 = vector.load %arg6[%c5, %c0_40] : memref<8x128xf32, #tpu.memory_space<vmem>>, vector<1x64xf32>
    %c6 = arith.constant 6 : index
    %c0_41 = arith.constant 0 : index
    %107 = vector.load %arg6[%c6, %c0_41] : memref<8x128xf32, #tpu.memory_space<vmem>>, vector<1x64xf32>
    %cst_42 = arith.constant dense<0.000000e+00> : vector<8xf32>
    %108 = vector.multi_reduction <add>, %105, %cst_42 [1] : vector<8x64xf32> to vector<8xf32>
    %109 = vector.shape_cast %108 : vector<8xf32> to vector<8x1xf32>
    %cst_43 = arith.constant 6.400000e+01 : f32
    %110 = vector.broadcast %cst_43 : f32 to vector<8x1xf32>
    %111 = arith.divf %109, %110 : vector<8x1xf32>
    %112 = vector.broadcast %111 : vector<8x1xf32> to vector<8x64xf32>
    %113 = arith.subf %105, %112 : vector<8x64xf32>
    %114 = arith.mulf %113, %113 : vector<8x64xf32>
    %cst_44 = arith.constant dense<0.000000e+00> : vector<8xf32>
    %115 = vector.multi_reduction <add>, %114, %cst_44 [1] : vector<8x64xf32> to vector<8xf32>
    %116 = vector.shape_cast %115 : vector<8xf32> to vector<8x1xf32>
    %cst_45 = arith.constant 6.400000e+01 : f32
    %117 = vector.broadcast %cst_45 : f32 to vector<8x1xf32>
    %118 = arith.divf %116, %117 : vector<8x1xf32>
    %119 = vector.broadcast %111 : vector<8x1xf32> to vector<8x64xf32>
    %120 = arith.subf %105, %119 : vector<8x64xf32>
    %cst_46 = arith.constant 9.99999974E-6 : f32
    %121 = vector.broadcast %cst_46 : f32 to vector<8x1xf32>
    %122 = arith.addf %118, %121 : vector<8x1xf32>
    %123 = math.rsqrt %122 : vector<8x1xf32>
    %124 = vector.broadcast %123 : vector<8x1xf32> to vector<8x64xf32>
    %125 = arith.mulf %120, %124 : vector<8x64xf32>
    %126 = vector.broadcast %106 : vector<1x64xf32> to vector<8x64xf32>
    %127 = arith.mulf %125, %126 : vector<8x64xf32>
    %128 = vector.broadcast %107 : vector<1x64xf32> to vector<8x64xf32>
    %129 = arith.addf %127, %128 : vector<8x64xf32>
    %cst_47 = arith.constant 0.000000e+00 : f32
    %130 = vector.broadcast %cst_47 : f32 to vector<8x64xf32>
    %131 = arith.maximumf %129, %130 : vector<8x64xf32>
    %c128_48 = arith.constant 128 : index
    %c0_49 = arith.constant 0 : index
    %132 = vector.load %arg5[%c128_48, %c0_49] : memref<192x128xf32, #tpu.memory_space<vmem>>, vector<64x128xf32>
    %cst_50 = arith.constant dense<0.000000e+00> : vector<8x128xf32>
    %133 = tpu.matmul %131, %132, %cst_50 {dimension_numbers = #tpu.dot_dimension_numbers<[1], [0], [0], [1], [0, 0, 1, 1], [], []>} : vector<8x64xf32>, vector<64x128xf32>, vector<8x128xf32> -> vector<8x128xf32>
    %c7 = arith.constant 7 : index
    %c0_51 = arith.constant 0 : index
    %134 = vector.load %arg6[%c7, %c0_51] : memref<8x128xf32, #tpu.memory_space<vmem>>, vector<1x128xf32>
    %135 = vector.broadcast %134 : vector<1x128xf32> to vector<8x128xf32>
    %136 = arith.addf %133, %135 : vector<8x128xf32>
    %137 = vector.extract_strided_slice %136 {offsets = [0, 0], sizes = [8, 64], strides = [1, 1]} : vector<8x128xf32> to vector<8x64xf32>
    %c5_52 = arith.constant 5 : index
    %c64_53 = arith.constant 64 : index
    %138 = vector.load %arg6[%c5_52, %c64_53] : memref<8x128xf32, #tpu.memory_space<vmem>>, vector<1x64xf32>
    %c6_54 = arith.constant 6 : index
    %c64_55 = arith.constant 64 : index
    %139 = vector.load %arg6[%c6_54, %c64_55] : memref<8x128xf32, #tpu.memory_space<vmem>>, vector<1x64xf32>
    %cst_56 = arith.constant dense<0.000000e+00> : vector<8xf32>
    %140 = vector.multi_reduction <add>, %137, %cst_56 [1] : vector<8x64xf32> to vector<8xf32>
    %141 = vector.shape_cast %140 : vector<8xf32> to vector<8x1xf32>
    %cst_57 = arith.constant 6.400000e+01 : f32
    %142 = vector.broadcast %cst_57 : f32 to vector<8x1xf32>
    %143 = arith.divf %141, %142 : vector<8x1xf32>
    %144 = vector.broadcast %143 : vector<8x1xf32> to vector<8x64xf32>
    %145 = arith.subf %137, %144 : vector<8x64xf32>
    %146 = arith.mulf %145, %145 : vector<8x64xf32>
    %cst_58 = arith.constant dense<0.000000e+00> : vector<8xf32>
    %147 = vector.multi_reduction <add>, %146, %cst_58 [1] : vector<8x64xf32> to vector<8xf32>
    %148 = vector.shape_cast %147 : vector<8xf32> to vector<8x1xf32>
    %cst_59 = arith.constant 6.400000e+01 : f32
    %149 = vector.broadcast %cst_59 : f32 to vector<8x1xf32>
    %150 = arith.divf %148, %149 : vector<8x1xf32>
    %151 = vector.broadcast %143 : vector<8x1xf32> to vector<8x64xf32>
    %152 = arith.subf %137, %151 : vector<8x64xf32>
    %cst_60 = arith.constant 9.99999974E-6 : f32
    %153 = vector.broadcast %cst_60 : f32 to vector<8x1xf32>
    %154 = arith.addf %150, %153 : vector<8x1xf32>
    %155 = math.rsqrt %154 : vector<8x1xf32>
    %156 = vector.broadcast %155 : vector<8x1xf32> to vector<8x64xf32>
    %157 = arith.mulf %152, %156 : vector<8x64xf32>
    %158 = vector.broadcast %138 : vector<1x64xf32> to vector<8x64xf32>
    %159 = arith.mulf %157, %158 : vector<8x64xf32>
    %160 = vector.broadcast %139 : vector<1x64xf32> to vector<8x64xf32>
    %161 = arith.addf %159, %160 : vector<8x64xf32>
    %162 = arith.addf %161, %96 : vector<8x64xf32>
    %cst_61 = arith.constant 0.000000e+00 : f32
    %163 = vector.broadcast %cst_61 : f32 to vector<8x64xf32>
    %164 = tpu.concatenate %162, %163 in 1 : vector<8x64xf32>, vector<8x64xf32> -> vector<8x128xf32>
    %165 = arith.addf %164, %85 : vector<8x128xf32>
    %c0_62 = arith.constant 0 : index
    %c0_63 = arith.constant 0 : index
    %166 = vector.load %arg7[%c0_62, %c0_63] : memref<8x128xf32, #tpu.memory_space<vmem>>, vector<8x128xf32>
    tpu.vector_store %arg7[%c0_62, %c0_63], %165 {strides = array<i32>} : memref<8x128xf32, #tpu.memory_space<vmem>>, vector<8x128xf32>,
    return
  }
  func.func @transform_0(%arg0: i32) -> (i32, i32) {
    %c0_i32 = arith.constant 0 : i32
    %c0_i32_0 = arith.constant 0 : i32
    return %arg0, %c0_i32 : i32, i32
  }
  func.func @transform_1(%arg0: i32) -> (i32, i32) {
    %c0_i32 = arith.constant 0 : i32
    %c0_i32_0 = arith.constant 0 : i32
    return %arg0, %c0_i32 : i32, i32
  }
  func.func @transform_2(%arg0: i32) -> (i32, i32) {
    %c0_i32 = arith.constant 0 : i32
    %c0_i32_0 = arith.constant 0 : i32
    return %arg0, %c0_i32 : i32, i32
  }
  func.func @transform_3(%arg0: i32) -> (i32, i32) {
    %c0_i32 = arith.constant 0 : i32
    %c0_i32_0 = arith.constant 0 : i32
    %c0_i32_1 = arith.constant 0 : i32
    return %c0_i32, %c0_i32_0 : i32, i32
  }
  func.func @transform_4(%arg0: i32) -> (i32, i32) {
    %c0_i32 = arith.constant 0 : i32
    %c0_i32_0 = arith.constant 0 : i32
    %c0_i32_1 = arith.constant 0 : i32
    return %c0_i32, %c0_i32_0 : i32, i32
  }
  func.func @transform_5(%arg0: i32) -> (i32, i32) {
    %c0_i32 = arith.constant 0 : i32
    %c0_i32_0 = arith.constant 0 : i32
    %c0_i32_1 = arith.constant 0 : i32
    return %c0_i32, %c0_i32_0 : i32, i32
  }
  func.func @transform_6(%arg0: i32) -> (i32, i32) {
    %c0_i32 = arith.constant 0 : i32
    %c0_i32_0 = arith.constant 0 : i32
    return %arg0, %c0_i32 : i32, i32
  }
}

</mosaic_0001>

<llo_original>
// kernel: tpu_custom_call.1
$region0: #{tpu_custom_call.1}
  #allocation0 [shape = 'u32[]', space=smem, size = 0x4, offset = 0x4, fixed_abs, tag = 'smem constant byte address 0x4 - core index']
  #allocation1 [shape = 'u32[144,128]{1,0:T(1,128)}', space=vmem, size = 0x12000, scoped, tag = 'internal scratch']
  %s0 = inlined_call_operand.hbm [shape: f32[8,64], index: 0, kind: input, shape index: {}]
  %s1 = inlined_call_operand.hbm [shape: f32[8,64], index: 1, kind: input, shape index: {}]
  %s2 = inlined_call_operand.hbm [shape: f32[8,64], index: 2, kind: input, shape index: {}]
  %s3 = inlined_call_operand.hbm [shape: f32[192,256], index: 3, kind: input, shape index: {}]
  %s4 = inlined_call_operand.hbm [shape: f32[192,128], index: 4, kind: input, shape index: {}]
  %s5 = inlined_call_operand.vmem [shape: f32[8,128], index: 5, kind: input, shape index: {}]
  %s6 = inlined_call_operand.hbm [shape: f32[8,128], index: 6, kind: output, shape index: {}]
  %s7 = sld [smem:[#allocation0]]
  $region54: #{tpu_custom_call.1} parent=0
    _
  %s9 = ssub.s32 1, %s7
  %s10 = scalar_select 0, %s9, %s7
  $region1: #{tpu_custom_call.1} parent=0
    #allocation2 [shape = 'u8[4096]{0}', space=vmem, size = 0x1000, scoped, tag = 'input window, operand 0, single buffered']
    #allocation3 [shape = 's32[1]{0}', space=sflag, size = 0x4, scoped, tag = 'scoped memory for tpu_custom_call.1']
    #allocation4 [shape = 's32[1]{0}', space=sflag, size = 0x4, scoped, tag = 'scoped memory for tpu_custom_call.1']
    #allocation5 [shape = 'u8[4096]{0}', space=vmem, size = 0x1000, scoped, tag = 'input window, operand 1, single buffered']
    #allocation6 [shape = 's32[1]{0}', space=sflag, size = 0x4, scoped, tag = 'scoped memory for tpu_custom_call.1']
    #allocation7 [shape = 'u8[4096]{0}', space=vmem, size = 0x1000, scoped, tag = 'input window, operand 2, single buffered']
    #allocation8 [shape = 'u8[196608]{0}', space=vmem, size = 0x30000, scoped, tag = 'input window, operand 3, single buffered']
    #allocation9 [shape = 's32[1]{0}', space=sflag, size = 0x4, scoped, tag = 'scoped memory for tpu_custom_call.1']
    #allocation10 [shape = 'u8[98304]{0}', space=vmem, size = 0x18000, scoped, tag = 'input window, operand 4, single buffered']
    #allocation11 [shape = 'u8[4096]{0}', space=vmem, size = 0x1000, scoped, tag = 'output window, operand 0, single buffered']
    %11 = vsyncpa [#allocation3], 0
    %12 = vsyncpa [#allocation6], 0
    %13 = vsyncpa [#allocation9], 0
    %14 = vsyncpa [#allocation4], 0
    // Predicated region
    $region2: #{tpu_custom_call.1} parent=1 // pred_check
      _
    $region3: #{tpu_custom_call.1} parent=1 // pred_check_branch
      %16 = sbr.rel (0) target = $region5
    $region4: #{tpu_custom_call.1} parent=1 // pred_region
      %s18 = ssub.s32 128, 128
      %19 = vsyncadd [#allocation3], %s18
      %s21 = sshll.u32 [#allocation2], 4
      %s22 = int_to_ptr.vmem [resolvable:$true] %s21
      %24 = dma.hbm_to_vmem [thread:$0]  %s0, 128, %s22, [#allocation3]
    $region5: #{tpu_custom_call.1} parent=1 // pred_fallthru
      _
    // Predicated region
    $region6: #{tpu_custom_call.1} parent=1 // pred_check
      _
    $region7: #{tpu_custom_call.1} parent=1 // pred_check_branch
      %26 = sbr.rel (0) target = $region9
    $region8: #{tpu_custom_call.1} parent=1 // pred_region
      %s28 = ssub.s32 128, 128
      %29 = vsyncadd [#allocation6], %s28
      %s31 = sshll.u32 [#allocation5], 4
      %s32 = int_to_ptr.vmem [resolvable:$true] %s31
      %34 = dma.hbm_to_vmem [thread:$0]  %s1, 128, %s32, [#allocation6]
    $region9: #{tpu_custom_call.1} parent=1 // pred_fallthru
      _
    // Predicated region
    $region10: #{tpu_custom_call.1} parent=1 // pred_check
      _
    $region11: #{tpu_custom_call.1} parent=1 // pred_check_branch
      %36 = sbr.rel (0) target = $region13
    $region12: #{tpu_custom_call.1} parent=1 // pred_region
      %s38 = ssub.s32 128, 128
      %39 = vsyncadd [#allocation6], %s38
      %s41 = sshll.u32 [#allocation7], 4
      %s42 = int_to_ptr.vmem [resolvable:$true] %s41
      %44 = dma.hbm_to_vmem [thread:$0]  %s2, 128, %s42, [#allocation6]
    $region13: #{tpu_custom_call.1} parent=1 // pred_fallthru
      _
    // Predicated region
    $region14: #{tpu_custom_call.1} parent=1 // pred_check
      _
    $region15: #{tpu_custom_call.1} parent=1 // pred_check_branch
      %46 = sbr.rel (0) target = $region17
    $region16: #{tpu_custom_call.1} parent=1 // pred_region
      %s48 = ssub.s32 6144, 6144
      %49 = vsyncadd [#allocation9], %s48
      %s50 = sshll.u32 [#allocation8], 4
      %s51 = int_to_ptr.vmem [resolvable:$true] %s50
      %56 = dma.hbm_to_vmem [thread:$0]  %s3, 6144, %s51, [#allocation9], 256, 256, 16
    $region17: #{tpu_custom_call.1} parent=1 // pred_fallthru
      _
    // Predicated region
    $region18: #{tpu_custom_call.1} parent=1 // pred_check
      _
    $region19: #{tpu_custom_call.1} parent=1 // pred_check_branch
      %58 = sbr.rel (0) target = $region21
    $region20: #{tpu_custom_call.1} parent=1 // pred_region
      %s60 = ssub.s32 3072, 3072
      %61 = vsyncadd [#allocation9], %s60
      %s62 = sshll.u32 [#allocation10], 4
      %s63 = int_to_ptr.vmem [resolvable:$true] %s62
      %68 = dma.hbm_to_vmem [thread:$0]  %s4, 3072, %s63, [#allocation9], 128, 128, 8
    $region21: #{tpu_custom_call.1} parent=1 // pred_fallthru
      _
    // Predicated region
    $region22: #{tpu_custom_call.1} parent=1 // pred_check
      _
    $region23: #{tpu_custom_call.1} parent=1 // pred_check_branch
      %70 = sbr.rel (0) target = $region25
    $region24: #{tpu_custom_call.1} parent=1 // pred_region
      _
    $region25: #{tpu_custom_call.1} parent=1 // pred_fallthru
      _
    // Predicated region
    $region26: #{tpu_custom_call.1} parent=1 // pred_check
      _
    $region27: #{tpu_custom_call.1} parent=1 // pred_check_branch
      %72 = sbr.rel (0) target = $region29
    $region28: #{tpu_custom_call.1} parent=1 // pred_region
      %73 = dma.done [#allocation3], 128
    $region29: #{tpu_custom_call.1} parent=1 // pred_fallthru
      _
    // Predicated region
    $region30: #{tpu_custom_call.1} parent=1 // pred_check
      _
    $region31: #{tpu_custom_call.1} parent=1 // pred_check_branch
      %75 = sbr.rel (0) target = $region33
    $region32: #{tpu_custom_call.1} parent=1 // pred_region
      %76 = dma.done [#allocation6], 128
    $region33: #{tpu_custom_call.1} parent=1 // pred_fallthru
      _
    // Predicated region
    $region34: #{tpu_custom_call.1} parent=1 // pred_check
      _
    $region35: #{tpu_custom_call.1} parent=1 // pred_check_branch
      %78 = sbr.rel (0) target = $region37
    $region36: #{tpu_custom_call.1} parent=1 // pred_region
      %79 = dma.done [#allocation6], 128
    $region37: #{tpu_custom_call.1} parent=1 // pred_fallthru
      _
    // Predicated region
    $region38: #{tpu_custom_call.1} parent=1 // pred_check
      _
    $region39: #{tpu_custom_call.1} parent=1 // pred_check_branch
      %81 = sbr.rel (0) target = $region41
    $region40: #{tpu_custom_call.1} parent=1 // pred_region
      %82 = dma.done [#allocation9], 6144
    $region41: #{tpu_custom_call.1} parent=1 // pred_fallthru
      _
    // Predicated region
    $region42: #{tpu_custom_call.1} parent=1 // pred_check
      _
    $region43: #{tpu_custom_call.1} parent=1 // pred_check_branch
      %84 = sbr.rel (0) target = $region45
    $region44: #{tpu_custom_call.1} parent=1 // pred_region
      %85 = dma.done [#allocation9], 3072
    $region45: #{tpu_custom_call.1} parent=1 // pred_fallthru
      _
    %v86 = vld [vmem:[#allocation2] sm:$0xff]
    %v87 = vld [vmem:[#allocation5] sm:$0xff]
    %v88 = vld [vmem:[#allocation7] sm:$0xff]
    %v89 = vld [vmem:[#allocation8] sm:$0xff]
    %v90 = vld [vmem:[#allocation8 + $0x8] sm:$0xff]
    %v91 = vld [vmem:[#allocation8 + $0x10] sm:$0xff]
    %v92 = vld [vmem:[#allocation8 + $0x18] sm:$0xff]
    %v93 = vld [vmem:[#allocation8 + $0x20] sm:$0xff]
    %v94 = vld [vmem:[#allocation8 + $0x28] sm:$0xff]
    %v95 = vld [vmem:[#allocation8 + $0x30] sm:$0xff]
    %v96 = vld [vmem:[#allocation8 + $0x38] sm:$0xff]
    %v97 = vld [vmem:[#allocation8 + $0x40] sm:$0xff]
    %v98 = vld [vmem:[#allocation8 + $0x48] sm:$0xff]
    %v99 = vld [vmem:[#allocation8 + $0x50] sm:$0xff]
    %v100 = vld [vmem:[#allocation8 + $0x58] sm:$0xff]
    %v101 = vld [vmem:[#allocation8 + $0x60] sm:$0xff]
    %v102 = vld [vmem:[#allocation8 + $0x68] sm:$0xff]
    %v103 = vld [vmem:[#allocation8 + $0x70] sm:$0xff]
    %v104 = vld [vmem:[#allocation8 + $0x78] sm:$0xff]
    %v105 = vld [vmem:[#allocation8 + $0x80] sm:$0xff]
    %v106 = vld [vmem:[#allocation8 + $0x88] sm:$0xff]
    %v107 = vld [vmem:[#allocation8 + $0x90] sm:$0xff]
    %v108 = vld [vmem:[#allocation8 + $0x98] sm:$0xff]
    %v109 = vld [vmem:[#allocation8 + $0xa0] sm:$0xff]
    %v110 = vld [vmem:[#allocation8 + $0xa8] sm:$0xff]
    %v111 = vld [vmem:[#allocation8 + $0xb0] sm:$0xff]
    %v112 = vld [vmem:[#allocation8 + $0xb8] sm:$0xff]
    %v113 = vld [vmem:[#allocation8 + $0xc0] sm:$0xff]
    %v114 = vld [vmem:[#allocation8 + $0xc8] sm:$0xff]
    %v115 = vld [vmem:[#allocation8 + $0xd0] sm:$0xff]
    %v116 = vld [vmem:[#allocation8 + $0xd8] sm:$0xff]
    %v117 = vld [vmem:[#allocation8 + $0xe0] sm:$0xff]
    %v118 = vld [vmem:[#allocation8 + $0xe8] sm:$0xff]
    %v119 = vld [vmem:[#allocation8 + $0xf0] sm:$0xff]
    %v120 = vld [vmem:[#allocation8 + $0xf8] sm:$0xff]
    %vm121 = vcmask 523264
    %v123 = vsel %vm121, %v87, 0
    %125 = vmatprep.subr.mxu0 %v106
    %126 = vmatpush1.msra.mxu0 %v105
    %127 = vmatprep.subr.mxu0 %v108
    %128 = vmatpush1.msra.mxu0 %v107
    %129 = vmatprep.subr.mxu0 %v110
    %130 = vmatpush1.msra.mxu0 %v109
    %131 = vmatprep.subr.mxu0 %v112
    %132 = vmatpush1.msra.mxu0 %v111
    %133 = vmatprep.subr.mxu0 %v114
    %134 = vmatpush1.msra.mxu0 %v113
    %135 = vmatprep.subr.mxu0 %v116
    %136 = vmatpush1.msra.mxu0 %v115
    %137 = vmatprep.subr.mxu0 %v118
    %138 = vmatpush1.msra.mxu0 %v117
    %139 = vmatprep.subr.mxu0 %v120
    %140 = vmatpush1.msra.mxu0 %v119
    %141 = vmatprep.subr.mxu0 0.0
    %142 = vmatpush1.msra.mxu0 0.0
    %143 = vmatprep.subr.mxu0 0.0
    %144 = vmatpush1.msra.mxu0 0.0
    %145 = vmatprep.subr.mxu0 0.0
    %146 = vmatpush1.msra.mxu0 0.0
    %147 = vmatprep.subr.mxu0 0.0
    %148 = vmatpush1.msra.mxu0 0.0
    %149 = vmatprep.subr.mxu0 0.0
    %150 = vmatpush1.msra.mxu0 0.0
    %151 = vmatprep.subr.mxu0 0.0
    %152 = vmatpush1.msra.mxu0 0.0
    %153 = vmatprep.subr.mxu0 0.0
    %154 = vmatpush1.msra.mxu0 0.0
    %155 = vmatprep.subr.mxu0 0.0
    %156 = vmatpush1.msra.mxu0 0.0
    %157 = vmatprep.subr.mxu0 0.0
    %158 = vmatpush1.msra.mxu0 0.0
    %159 = vmatprep.subr.mxu0 0.0
    %160 = vmatpush1.msra.mxu0 0.0
    %161 = vmatprep.subr.mxu0 0.0
    %162 = vmatpush1.msra.mxu0 0.0
    %163 = vmatprep.subr.mxu0 0.0
    %164 = vmatpush1.msra.mxu0 0.0
    %165 = vmatprep.subr.mxu0 0.0
    %166 = vmatpush1.msra.mxu0 0.0
    %167 = vmatprep.subr.mxu0 0.0
    %168 = vmatpush1.msra.mxu0 0.0
    %169 = vmatprep.subr.mxu0 0.0
    %170 = vmatpush1.msra.mxu0 0.0
    %171 = vmatprep.subr.mxu0 0.0
    %172 = vmatpush1.msra.mxu0 0.0
    %173 = vmatprep.subr.mxu0 0.0
    %174 = vmatpush1.msra.mxu0 0.0
    %175 = vmatprep.subr.mxu0 0.0
    %176 = vmatpush1.msra.mxu0 0.0
    %177 = vmatprep.subr.mxu0 0.0
    %178 = vmatpush1.msra.mxu0 0.0
    %179 = vmatprep.subr.mxu0 0.0
    %180 = vmatpush1.msra.mxu0 0.0
    %181 = vmatprep.subr.mxu0 0.0
    %182 = vmatpush1.msra.mxu0 0.0
    %183 = vmatprep.subr.mxu0 0.0
    %184 = vmatpush1.msra.mxu0 0.0
    %185 = vmatprep.subr.mxu0 0.0
    %186 = vmatpush1.msra.mxu0 0.0
    %187 = vmatprep.subr.mxu0 0.0
    %188 = vmatpush1.msra.mxu0 0.0
    %189 = vmatprep.mubr.f32.mxu0 0.0
    %190 = vmatmul.mubr.f32.gmra.mrb[0].mxu0 %v123
    %v191 = vpop.f32.mrb[0].mxu0
    %v192 = vadd.f32 0.0, %v191
    %v193 = vpop.f32.mrb[0].mxu0
    %v194 = vadd.f32 0.0, %v193
    %195 = vdwg.mxu0
    %v197 = vsel %vm121, %v86, 0
    %199 = vmatprep.subr.mxu0 %v90
    %200 = vmatpush1.msra.mxu0 %v89
    %201 = vmatprep.subr.mxu0 %v92
    %202 = vmatpush1.msra.mxu0 %v91
    %203 = vmatprep.subr.mxu0 %v94
    %204 = vmatpush1.msra.mxu0 %v93
    %205 = vmatprep.subr.mxu0 %v96
    %206 = vmatpush1.msra.mxu0 %v95
    %207 = vmatprep.subr.mxu0 %v98
    %208 = vmatpush1.msra.mxu0 %v97
    %209 = vmatprep.subr.mxu0 %v100
    %210 = vmatpush1.msra.mxu0 %v99
    %211 = vmatprep.subr.mxu0 %v102
    %212 = vmatpush1.msra.mxu0 %v101
    %213 = vmatprep.subr.mxu0 %v104
    %214 = vmatpush1.msra.mxu0 %v103
    %215 = vmatprep.subr.mxu0 0.0
    %216 = vmatpush1.msra.mxu0 0.0
    %217 = vmatprep.subr.mxu0 0.0
    %218 = vmatpush1.msra.mxu0 0.0
    %219 = vmatprep.subr.mxu0 0.0
    %220 = vmatpush1.msra.mxu0 0.0
    %221 = vmatprep.subr.mxu0 0.0
    %222 = vmatpush1.msra.mxu0 0.0
    %223 = vmatprep.subr.mxu0 0.0
    %224 = vmatpush1.msra.mxu0 0.0
    %225 = vmatprep.subr.mxu0 0.0
    %226 = vmatpush1.msra.mxu0 0.0
    %227 = vmatprep.subr.mxu0 0.0
    %228 = vmatpush1.msra.mxu0 0.0
    %229 = vmatprep.subr.mxu0 0.0
    %230 = vmatpush1.msra.mxu0 0.0
    %231 = vmatprep.subr.mxu0 0.0
    %232 = vmatpush1.msra.mxu0 0.0
    %233 = vmatprep.subr.mxu0 0.0
    %234 = vmatpush1.msra.mxu0 0.0
    %235 = vmatprep.subr.mxu0 0.0
    %236 = vmatpush1.msra.mxu0 0.0
    %237 = vmatprep.subr.mxu0 0.0
    %238 = vmatpush1.msra.mxu0 0.0
    %239 = vmatprep.subr.mxu0 0.0
    %240 = vmatpush1.msra.mxu0 0.0
    %241 = vmatprep.subr.mxu0 0.0
    %242 = vmatpush1.msra.mxu0 0.0
    %243 = vmatprep.subr.mxu0 0.0
    %244 = vmatpush1.msra.mxu0 0.0
    %245 = vmatprep.subr.mxu0 0.0
    %246 = vmatpush1.msra.mxu0 0.0
    %247 = vmatprep.subr.mxu0 0.0
    %248 = vmatpush1.msra.mxu0 0.0
    %249 = vmatprep.subr.mxu0 0.0
    %250 = vmatpush1.msra.mxu0 0.0
    %251 = vmatprep.subr.mxu0 0.0
    %252 = vmatpush1.msra.mxu0 0.0
    %253 = vmatprep.subr.mxu0 0.0
    %254 = vmatpush1.msra.mxu0 0.0
    %255 = vmatprep.subr.mxu0 0.0
    %256 = vmatpush1.msra.mxu0 0.0
    %257 = vmatprep.subr.mxu0 0.0
    %258 = vmatpush1.msra.mxu0 0.0
    %259 = vmatprep.subr.mxu0 0.0
    %260 = vmatpush1.msra.mxu0 0.0
    %261 = vmatprep.subr.mxu0 0.0
    %262 = vmatpush1.msra.mxu0 0.0
    %263 = vmatprep.mubr.f32.mxu0 0.0
    %264 = vmatmul.mubr.f32.gmra.mrb[0].mxu0 %v197
    %v265 = vpop.f32.mrb[0].mxu0
    %v266 = vadd.f32 %v192, %v265
    %v267 = vpop.f32.mrb[0].mxu0
    %v268 = vadd.f32 %v194, %v267
    %269 = vdwg.mxu0
    %v270 = vld [vmem:[#allocation8 + $0x100] sm:$0xff]
    %v271 = vld [vmem:[#allocation8 + $0x108] sm:$0xff]
    %v272 = vld [vmem:[#allocation8 + $0x110] sm:$0xff]
    %v273 = vld [vmem:[#allocation8 + $0x118] sm:$0xff]
    %v274 = vld [vmem:[#allocation8 + $0x120] sm:$0xff]
    %v275 = vld [vmem:[#allocation8 + $0x128] sm:$0xff]
    %v276 = vld [vmem:[#allocation8 + $0x130] sm:$0xff]
    %v277 = vld [vmem:[#allocation8 + $0x138] sm:$0xff]
    %v278 = vld [vmem:[#allocation8 + $0x140] sm:$0xff]
    %v279 = vld [vmem:[#allocation8 + $0x148] sm:$0xff]
    %v280 = vld [vmem:[#allocation8 + $0x150] sm:$0xff]
    %v281 = vld [vmem:[#allocation8 + $0x158] sm:$0xff]
    %v282 = vld [vmem:[#allocation8 + $0x160] sm:$0xff]
    %v283 = vld [vmem:[#allocation8 + $0x168] sm:$0xff]
    %v284 = vld [vmem:[#allocation8 + $0x170] sm:$0xff]
    %v285 = vld [vmem:[#allocation8 + $0x178] sm:$0xff]
    %v287 = vsel %vm121, %v88, 0
    %289 = vmatprep.subr.mxu0 %v271
    %290 = vmatpush1.msra.mxu0 %v270
    %291 = vmatprep.subr.mxu0 %v273
    %292 = vmatpush1.msra.mxu0 %v272
    %293 = vmatprep.subr.mxu0 %v275
    %294 = vmatpush1.msra.mxu0 %v274
    %295 = vmatprep.subr.mxu0 %v277
    %296 = vmatpush1.msra.mxu0 %v276
    %297 = vmatprep.subr.mxu0 %v279
    %298 = vmatpush1.msra.mxu0 %v278
    %299 = vmatprep.subr.mxu0 %v281
    %300 = vmatpush1.msra.mxu0 %v280
    %301 = vmatprep.subr.mxu0 %v283
    %302 = vmatpush1.msra.mxu0 %v282
    %303 = vmatprep.subr.mxu0 %v285
    %304 = vmatpush1.msra.mxu0 %v284
    %305 = vmatprep.subr.mxu0 0.0
    %306 = vmatpush1.msra.mxu0 0.0
    %307 = vmatprep.subr.mxu0 0.0
    %308 = vmatpush1.msra.mxu0 0.0
    %309 = vmatprep.subr.mxu0 0.0
    %310 = vmatpush1.msra.mxu0 0.0
    %311 = vmatprep.subr.mxu0 0.0
    %312 = vmatpush1.msra.mxu0 0.0
    %313 = vmatprep.subr.mxu0 0.0
    %314 = vmatpush1.msra.mxu0 0.0
    %315 = vmatprep.subr.mxu0 0.0
    %316 = vmatpush1.msra.mxu0 0.0
    %317 = vmatprep.subr.mxu0 0.0
    %318 = vmatpush1.msra.mxu0 0.0
    %319 = vmatprep.subr.mxu0 0.0
    %320 = vmatpush1.msra.mxu0 0.0
    %321 = vmatprep.subr.mxu0 0.0
    %322 = vmatpush1.msra.mxu0 0.0
    %323 = vmatprep.subr.mxu0 0.0
    %324 = vmatpush1.msra.mxu0 0.0
    %325 = vmatprep.subr.mxu0 0.0
    %326 = vmatpush1.msra.mxu0 0.0
    %327 = vmatprep.subr.mxu0 0.0
    %328 = vmatpush1.msra.mxu0 0.0
    %329 = vmatprep.subr.mxu0 0.0
    %330 = vmatpush1.msra.mxu0 0.0
    %331 = vmatprep.subr.mxu0 0.0
    %332 = vmatpush1.msra.mxu0 0.0
    %333 = vmatprep.subr.mxu0 0.0
    %334 = vmatpush1.msra.mxu0 0.0
    %335 = vmatprep.subr.mxu0 0.0
    %336 = vmatpush1.msra.mxu0 0.0
    %337 = vmatprep.subr.mxu0 0.0
    %338 = vmatpush1.msra.mxu0 0.0
    %339 = vmatprep.subr.mxu0 0.0
    %340 = vmatpush1.msra.mxu0 0.0
    %341 = vmatprep.subr.mxu0 0.0
    %342 = vmatpush1.msra.mxu0 0.0
    %343 = vmatprep.subr.mxu0 0.0
    %344 = vmatpush1.msra.mxu0 0.0
    %345 = vmatprep.subr.mxu0 0.0
    %346 = vmatpush1.msra.mxu0 0.0
    %347 = vmatprep.subr.mxu0 0.0
    %348 = vmatpush1.msra.mxu0 0.0
    %349 = vmatprep.subr.mxu0 0.0
    %350 = vmatpush1.msra.mxu0 0.0
    %351 = vmatprep.subr.mxu0 0.0
    %352 = vmatpush1.msra.mxu0 0.0
    %353 = vmatprep.mubr.f32.mxu0 0.0
    %354 = vmatmul.mubr.f32.gmra.mrb[0].mxu0 %v287
    %v355 = vpop.f32.mrb[0].mxu0
    %v356 = vadd.f32 0.0, %v355
    %v357 = vpop.f32.mrb[0].mxu0
    %v358 = vadd.f32 0.0, %v357
    %359 = vdwg.mxu0
    %v360 = vadd.f32 %v266, %v356
    %v361 = vadd.f32 %v268, %v358
    %v362 = vld [vmem:[%s5] sm:$0x1]
    %v363 = vlaneseq
    %v364 = vshrl.u32 %v363, 7
    %v365 = vsub.s32 0, %v364
    %v366 = vrot.slane %v362, %v365
    %v367 = vadd.f32 %v360, %v366
    %v368 = vld [vmem:[%s5 + $0x1] sm:$0x1]
    %v369 = vld [vmem:[%s5 + $0x2] sm:$0x1]
    %v370 = vsel %vm121, %v367, 0.0
    %371 = vadd.xlane.f32.xlu0 %v370
    %v372 = vpop.xlane.xlu0 %371
    %v373 = vrcp.pop 64.0
    %v374 = vmul.f32 %v372, %v373
    %v375 = vsub.f32 %v367, %v374
    %v376 = vmul.f32 %v375, %v375
    %v377 = vsel %vm121, %v376, 0.0
    %378 = vadd.xlane.f32.xlu0 %v377
    %v379 = vpop.xlane.xlu0 %378
    %v380 = vmul.f32 %v379, %v373
    %v381 = vadd.f32 %v380, 1e-05
    %v382 = vrsqrt.pop %v381
    %v383 = vmul.f32 %v375, %v382
    %v384 = vlaneseq
    %v385 = vshrl.u32 %v384, 7
    %v386 = vsub.s32 0, %v385
    %v387 = vrot.slane %v368, %v386
    %v388 = vmul.f32 %v383, %v387
    %v389 = vlaneseq
    %v390 = vshrl.u32 %v389, 7
    %v391 = vsub.s32 0, %v390
    %v392 = vrot.slane %v369, %v391
    %v393 = vadd.f32 %v388, %v392
    %v394 = vtanh.pop %v393
    %396 = vrot.lane.b32.xlu0 %v367, 64
    %v397 = vpop.permute.xlu0 %396
    %v399 = vsel %vm121, %v397, 0.0
    %400 = vadd.xlane.f32.xlu0 %v399
    %v401 = vpop.xlane.xlu0 %400
    %v402 = vmul.f32 %v401, %v373
    %v403 = vsub.f32 %v367, %v402
    %v404 = vmul.f32 %v403, %v403
    %406 = vrot.lane.b32.xlu0 %v404, 64
    %v407 = vpop.permute.xlu0 %406
    %v409 = vsel %vm121, %v407, 0.0
    %410 = vadd.xlane.f32.xlu0 %v409
    %v411 = vpop.xlane.xlu0 %410
    %v412 = vmul.f32 %v411, %v373
    %v413 = vadd.f32 %v412, 1e-05
    %v414 = vrsqrt.pop %v413
    %v415 = vmul.f32 %v403, %v414
    %v416 = vmul.f32 %v415, %v387
    %v417 = vadd.f32 %v416, %v392
    %v418 = vxor.u32 %v417, 2147483648
    %v419 = vmul.f32 %v418, 1.442695
    %v420 = vpow.pop %v419
    %v421 = vadd.f32 %v420, 1.0
    %v422 = vrcp.pop %v421
    %v423 = vmul.f32 1.0, %v422
    %v424 = vld [vmem:[#allocation10 + $0x40] sm:$0xff]
    %v425 = vld [vmem:[#allocation10 + $0x48] sm:$0xff]
    %v426 = vld [vmem:[#allocation10 + $0x50] sm:$0xff]
    %v427 = vld [vmem:[#allocation10 + $0x58] sm:$0xff]
    %v428 = vld [vmem:[#allocation10 + $0x60] sm:$0xff]
    %v429 = vld [vmem:[#allocation10 + $0x68] sm:$0xff]
    %v430 = vld [vmem:[#allocation10 + $0x70] sm:$0xff]
    %v431 = vld [vmem:[#allocation10 + $0x78] sm:$0xff]
    %v432 = vld [vmem:[%s5 + $0x3] sm:$0x1]
    %v433 = vlaneseq
    %v434 = vshrl.u32 %v433, 7
    %v435 = vsub.s32 0, %v434
    %v436 = vrot.slane %v432, %v435
    %v438 = vsel %vm121, %v394, 0
    %440 = vmatprep.subr.mxu0 0.0
    %441 = vmatpush1.msra.mxu0 %v424
    %442 = vmatprep.subr.mxu0 0.0
    %443 = vmatpush1.msra.mxu0 %v425
    %444 = vmatprep.subr.mxu0 0.0
    %445 = vmatpush1.msra.mxu0 %v426
    %446 = vmatprep.subr.mxu0 0.0
    %447 = vmatpush1.msra.mxu0 %v427
    %448 = vmatprep.subr.mxu0 0.0
    %449 = vmatpush1.msra.mxu0 %v428
    %450 = vmatprep.subr.mxu0 0.0
    %451 = vmatpush1.msra.mxu0 %v429
    %452 = vmatprep.subr.mxu0 0.0
    %453 = vmatpush1.msra.mxu0 %v430
    %454 = vmatprep.subr.mxu0 0.0
    %455 = vmatpush1.msra.mxu0 %v431
    %456 = vmatprep.subr.mxu0 0.0
    %457 = vmatpush1.msra.mxu0 0.0
    %458 = vmatprep.subr.mxu0 0.0
    %459 = vmatpush1.msra.mxu0 0.0
    %460 = vmatprep.subr.mxu0 0.0
    %461 = vmatpush1.msra.mxu0 0.0
    %462 = vmatprep.subr.mxu0 0.0
    %463 = vmatpush1.msra.mxu0 0.0
    %464 = vmatprep.subr.mxu0 0.0
    %465 = vmatpush1.msra.mxu0 0.0
    %466 = vmatprep.subr.mxu0 0.0
    %467 = vmatpush1.msra.mxu0 0.0
    %468 = vmatprep.subr.mxu0 0.0
    %469 = vmatpush1.msra.mxu0 0.0
    %470 = vmatprep.subr.mxu0 0.0
    %471 = vmatpush1.msra.mxu0 0.0
    %472 = vmatprep.subr.mxu0 0.0
    %473 = vmatpush1.msra.mxu0 0.0
    %474 = vmatprep.subr.mxu0 0.0
    %475 = vmatpush1.msra.mxu0 0.0
    %476 = vmatprep.subr.mxu0 0.0
    %477 = vmatpush1.msra.mxu0 0.0
    %478 = vmatprep.subr.mxu0 0.0
    %479 = vmatpush1.msra.mxu0 0.0
    %480 = vmatprep.subr.mxu0 0.0
    %481 = vmatpush1.msra.mxu0 0.0
    %482 = vmatprep.subr.mxu0 0.0
    %483 = vmatpush1.msra.mxu0 0.0
    %484 = vmatprep.subr.mxu0 0.0
    %485 = vmatpush1.msra.mxu0 0.0
    %486 = vmatprep.subr.mxu0 0.0
    %487 = vmatpush1.msra.mxu0 0.0
    %488 = vmatprep.subr.mxu0 0.0
    %489 = vmatpush1.msra.mxu0 0.0
    %490 = vmatprep.subr.mxu0 0.0
    %491 = vmatpush1.msra.mxu0 0.0
    %492 = vmatprep.subr.mxu0 0.0
    %493 = vmatpush1.msra.mxu0 0.0
    %494 = vmatprep.subr.mxu0 0.0
    %495 = vmatpush1.msra.mxu0 0.0
    %496 = vmatprep.subr.mxu0 0.0
    %497 = vmatpush1.msra.mxu0 0.0
    %498 = vmatprep.subr.mxu0 0.0
    %499 = vmatpush1.msra.mxu0 0.0
    %500 = vmatprep.subr.mxu0 0.0
    %501 = vmatpush1.msra.mxu0 0.0
    %502 = vmatprep.subr.mxu0 0.0
    %503 = vmatpush1.msra.mxu0 0.0
    %504 = vmatprep.mubr.f32.mxu0 0.0
    %505 = vmatmul.mubr.f32.gmra.mrb[0].mxu0 %v438
    %v506 = vpop.f32.mrb[0].mxu0
    %v507 = vadd.f32 %v436, %v506
    %v508 = vpop.f32.mrb[0].mxu0
    %509 = vdwg.mxu0
    %510 = vmax.xlane.f32.xlu0 %v507
    %v511 = vpop.xlane.xlu0 %510
    %v512 = vsub.f32 %v507, %v511
    %v513 = vmul.f32 %v512, 1.442695
    %v514 = vpow.pop %v513
    %515 = vadd.xlane.f32.xlu0 %v514
    %v516 = vpop.xlane.xlu0 %515
    %v517 = vrcp.pop %v516
    %v518 = vmul.f32 %v514, %v517
    %520 = vset.pattern.permute.xlu0 64
    %521 = vperm.xlu0 %520, %v518
    %v522 = vpop.permute.xlu0 %521
    %v524 = vmul.f32 %v522, %v86
    %525 = vset.pattern.permute.xlu0 65
    %526 = vperm.xlu0 %525, %v518
    %v527 = vpop.permute.xlu0 %526
    %v529 = vmul.f32 %v527, %v87
    %v530 = vadd.f32 %v524, %v529
    %531 = vset.pattern.permute.xlu0 66
    %532 = vperm.xlu0 %531, %v518
    %v533 = vpop.permute.xlu0 %532
    %v535 = vmul.f32 %v533, %v88
    %v536 = vadd.f32 %v530, %v535
    %538 = vrot.lane.b32.xlu0 %v423, 64
    %v539 = vpop.permute.xlu0 %538
    %v541 = vmul.f32 %v536, %v539
    %v542 = vld [vmem:[#allocation10] sm:$0xff]
    %v543 = vld [vmem:[#allocation10 + $0x8] sm:$0xff]
    %v544 = vld [vmem:[#allocation10 + $0x10] sm:$0xff]
    %v545 = vld [vmem:[#allocation10 + $0x18] sm:$0xff]
    %v546 = vld [vmem:[#allocation10 + $0x20] sm:$0xff]
    %v547 = vld [vmem:[#allocation10 + $0x28] sm:$0xff]
    %v548 = vld [vmem:[#allocation10 + $0x30] sm:$0xff]
    %v549 = vld [vmem:[#allocation10 + $0x38] sm:$0xff]
    %v551 = vsel %vm121, %v541, 0
    %553 = vmatprep.subr.mxu0 0.0
    %554 = vmatpush1.msra.mxu0 %v542
    %555 = vmatprep.subr.mxu0 0.0
    %556 = vmatpush1.msra.mxu0 %v543
    %557 = vmatprep.subr.mxu0 0.0
    %558 = vmatpush1.msra.mxu0 %v544
    %559 = vmatprep.subr.mxu0 0.0
    %560 = vmatpush1.msra.mxu0 %v545
    %561 = vmatprep.subr.mxu0 0.0
    %562 = vmatpush1.msra.mxu0 %v546
    %563 = vmatprep.subr.mxu0 0.0
    %564 = vmatpush1.msra.mxu0 %v547
    %565 = vmatprep.subr.mxu0 0.0
    %566 = vmatpush1.msra.mxu0 %v548
    %567 = vmatprep.subr.mxu0 0.0
    %568 = vmatpush1.msra.mxu0 %v549
    %569 = vmatprep.subr.mxu0 0.0
    %570 = vmatpush1.msra.mxu0 0.0
    %571 = vmatprep.subr.mxu0 0.0
    %572 = vmatpush1.msra.mxu0 0.0
    %573 = vmatprep.subr.mxu0 0.0
    %574 = vmatpush1.msra.mxu0 0.0
    %575 = vmatprep.subr.mxu0 0.0
    %576 = vmatpush1.msra.mxu0 0.0
    %577 = vmatprep.subr.mxu0 0.0
    %578 = vmatpush1.msra.mxu0 0.0
    %579 = vmatprep.subr.mxu0 0.0
    %580 = vmatpush1.msra.mxu0 0.0
    %581 = vmatprep.subr.mxu0 0.0
    %582 = vmatpush1.msra.mxu0 0.0
    %583 = vmatprep.subr.mxu0 0.0
    %584 = vmatpush1.msra.mxu0 0.0
    %585 = vmatprep.subr.mxu0 0.0
    %586 = vmatpush1.msra.mxu0 0.0
    %587 = vmatprep.subr.mxu0 0.0
    %588 = vmatpush1.msra.mxu0 0.0
    %589 = vmatprep.subr.mxu0 0.0
    %590 = vmatpush1.msra.mxu0 0.0
    %591 = vmatprep.subr.mxu0 0.0
    %592 = vmatpush1.msra.mxu0 0.0
    %593 = vmatprep.subr.mxu0 0.0
    %594 = vmatpush1.msra.mxu0 0.0
    %595 = vmatprep.subr.mxu0 0.0
    %596 = vmatpush1.msra.mxu0 0.0
    %597 = vmatprep.subr.mxu0 0.0
    %598 = vmatpush1.msra.mxu0 0.0
    %599 = vmatprep.subr.mxu0 0.0
    %600 = vmatpush1.msra.mxu0 0.0
    %601 = vmatprep.subr.mxu0 0.0
    %602 = vmatpush1.msra.mxu0 0.0
    %603 = vmatprep.subr.mxu0 0.0
    %604 = vmatpush1.msra.mxu0 0.0
    %605 = vmatprep.subr.mxu0 0.0
    %606 = vmatpush1.msra.mxu0 0.0
    %607 = vmatprep.subr.mxu0 0.0
    %608 = vmatpush1.msra.mxu0 0.0
    %609 = vmatprep.subr.mxu0 0.0
    %610 = vmatpush1.msra.mxu0 0.0
    %611 = vmatprep.subr.mxu0 0.0
    %612 = vmatpush1.msra.mxu0 0.0
    %613 = vmatprep.subr.mxu0 0.0
    %614 = vmatpush1.msra.mxu0 0.0
    %615 = vmatprep.subr.mxu0 0.0
    %616 = vmatpush1.msra.mxu0 0.0
    %617 = vmatprep.mubr.f32.mxu0 0.0
    %618 = vmatmul.mubr.f32.gmra.mrb[0].mxu0 %v551
    %v619 = vpop.f32.mrb[0].mxu0
    %v620 = vadd.f32 %v361, %v619
    %v621 = vpop.f32.mrb[0].mxu0
    %622 = vdwg.mxu0
    %v623 = vld [vmem:[%s5 + $0x4] sm:$0x1]
    %v624 = vlaneseq
    %v625 = vshrl.u32 %v624, 7
    %v626 = vsub.s32 0, %v625
    %v627 = vrot.slane %v623, %v626
    %v628 = vadd.f32 %v620, %v627
    %v629 = vld [vmem:[%s5 + $0x5] sm:$0x1]
    %v630 = vld [vmem:[%s5 + $0x6] sm:$0x1]
    %v631 = vsel %vm121, %v628, 0.0
    %632 = vadd.xlane.f32.xlu0 %v631
    %v633 = vpop.xlane.xlu0 %632
    %v634 = vmul.f32 %v633, %v373
    %v635 = vsub.f32 %v628, %v634
    %v636 = vmul.f32 %v635, %v635
    %v637 = vsel %vm121, %v636, 0.0
    %638 = vadd.xlane.f32.xlu0 %v637
    %v639 = vpop.xlane.xlu0 %638
    %v640 = vmul.f32 %v639, %v373
    %v641 = vadd.f32 %v640, 1e-05
    %v642 = vrsqrt.pop %v641
    %v643 = vmul.f32 %v635, %v642
    %v644 = vlaneseq
    %v645 = vshrl.u32 %v644, 7
    %v646 = vsub.s32 0, %v645
    %v647 = vrot.slane %v629, %v646
    %v648 = vmul.f32 %v643, %v647
    %v649 = vlaneseq
    %v650 = vshrl.u32 %v649, 7
    %v651 = vsub.s32 0, %v650
    %v652 = vrot.slane %v630, %v651
    %v653 = vadd.f32 %v648, %v652
    %v654 = vmax.f32 %v653, 0.0
    %v655 = vld [vmem:[#allocation10 + $0x80] sm:$0xff]
    %v656 = vld [vmem:[#allocation10 + $0x88] sm:$0xff]
    %v657 = vld [vmem:[#allocation10 + $0x90] sm:$0xff]
    %v658 = vld [vmem:[#allocation10 + $0x98] sm:$0xff]
    %v659 = vld [vmem:[#allocation10 + $0xa0] sm:$0xff]
    %v660 = vld [vmem:[#allocation10 + $0xa8] sm:$0xff]
    %v661 = vld [vmem:[#allocation10 + $0xb0] sm:$0xff]
    %v662 = vld [vmem:[#allocation10 + $0xb8] sm:$0xff]
    %v663 = vld [vmem:[%s5 + $0x7] sm:$0x1]
    %v664 = vlaneseq
    %v665 = vshrl.u32 %v664, 7
    %v666 = vsub.s32 0, %v665
    %v667 = vrot.slane %v663, %v666
    %v669 = vsel %vm121, %v654, 0
    %671 = vmatprep.subr.mxu0 0.0
    %672 = vmatpush1.msra.mxu0 %v655
    %673 = vmatprep.subr.mxu0 0.0
    %674 = vmatpush1.msra.mxu0 %v656
    %675 = vmatprep.subr.mxu0 0.0
    %676 = vmatpush1.msra.mxu0 %v657
    %677 = vmatprep.subr.mxu0 0.0
    %678 = vmatpush1.msra.mxu0 %v658
    %679 = vmatprep.subr.mxu0 0.0
    %680 = vmatpush1.msra.mxu0 %v659
    %681 = vmatprep.subr.mxu0 0.0
    %682 = vmatpush1.msra.mxu0 %v660
    %683 = vmatprep.subr.mxu0 0.0
    %684 = vmatpush1.msra.mxu0 %v661
    %685 = vmatprep.subr.mxu0 0.0
    %686 = vmatpush1.msra.mxu0 %v662
    %687 = vmatprep.subr.mxu0 0.0
    %688 = vmatpush1.msra.mxu0 0.0
    %689 = vmatprep.subr.mxu0 0.0
    %690 = vmatpush1.msra.mxu0 0.0
    %691 = vmatprep.subr.mxu0 0.0
    %692 = vmatpush1.msra.mxu0 0.0
    %693 = vmatprep.subr.mxu0 0.0
    %694 = vmatpush1.msra.mxu0 0.0
    %695 = vmatprep.subr.mxu0 0.0
    %696 = vmatpush1.msra.mxu0 0.0
    %697 = vmatprep.subr.mxu0 0.0
    %698 = vmatpush1.msra.mxu0 0.0
    %699 = vmatprep.subr.mxu0 0.0
    %700 = vmatpush1.msra.mxu0 0.0
    %701 = vmatprep.subr.mxu0 0.0
    %702 = vmatpush1.msra.mxu0 0.0
    %703 = vmatprep.subr.mxu0 0.0
    %704 = vmatpush1.msra.mxu0 0.0
    %705 = vmatprep.subr.mxu0 0.0
    %706 = vmatpush1.msra.mxu0 0.0
    %707 = vmatprep.subr.mxu0 0.0
    %708 = vmatpush1.msra.mxu0 0.0
    %709 = vmatprep.subr.mxu0 0.0
    %710 = vmatpush1.msra.mxu0 0.0
    %711 = vmatprep.subr.mxu0 0.0
    %712 = vmatpush1.msra.mxu0 0.0
    %713 = vmatprep.subr.mxu0 0.0
    %714 = vmatpush1.msra.mxu0 0.0
    %715 = vmatprep.subr.mxu0 0.0
    %716 = vmatpush1.msra.mxu0 0.0
    %717 = vmatprep.subr.mxu0 0.0
    %718 = vmatpush1.msra.mxu0 0.0
    %719 = vmatprep.subr.mxu0 0.0
    %720 = vmatpush1.msra.mxu0 0.0
    %721 = vmatprep.subr.mxu0 0.0
    %722 = vmatpush1.msra.mxu0 0.0
    %723 = vmatprep.subr.mxu0 0.0
    %724 = vmatpush1.msra.mxu0 0.0
    %725 = vmatprep.subr.mxu0 0.0
    %726 = vmatpush1.msra.mxu0 0.0
    %727 = vmatprep.subr.mxu0 0.0
    %728 = vmatpush1.msra.mxu0 0.0
    %729 = vmatprep.subr.mxu0 0.0
    %730 = vmatpush1.msra.mxu0 0.0
    %731 = vmatprep.subr.mxu0 0.0
    %732 = vmatpush1.msra.mxu0 0.0
    %733 = vmatprep.subr.mxu0 0.0
    %734 = vmatpush1.msra.mxu0 0.0
    %735 = vmatprep.mubr.f32.mxu0 0.0
    %736 = vmatmul.mubr.f32.gmra.mrb[0].mxu0 %v669
    %v737 = vpop.f32.mrb[0].mxu0
    %v738 = vadd.f32 %v667, %v737
    %v739 = vpop.f32.mrb[0].mxu0
    %740 = vdwg.mxu0
    %v741 = vsel %vm121, %v738, 0.0
    %742 = vadd.xlane.f32.xlu0 %v741
    %v743 = vpop.xlane.xlu0 %742
    %v744 = vmul.f32 %v743, %v373
    %v745 = vsub.f32 %v738, %v744
    %v746 = vmul.f32 %v745, %v745
    %v747 = vsel %vm121, %v746, 0.0
    %748 = vadd.xlane.f32.xlu0 %v747
    %v749 = vpop.xlane.xlu0 %748
    %v750 = vmul.f32 %v749, %v373
    %v751 = vadd.f32 %v750, 1e-05
    %v752 = vrsqrt.pop %v751
    %v753 = vmul.f32 %v745, %v752
    %755 = vrot.lane.b32.xlu0 %v647, 64
    %v756 = vpop.permute.xlu0 %755
    %v758 = vmul.f32 %v753, %v756
    %760 = vrot.lane.b32.xlu0 %v652, 64
    %v761 = vpop.permute.xlu0 %760
    %v763 = vadd.f32 %v758, %v761
    %v764 = vadd.f32 %v763, %v536
    %v765 = vsel %vm121, %v764, 0.0
    %v766 = vadd.f32 %v765, %v518
    %767 = vst [vmem:[#allocation11] sm:$0xff] %v766
    // Predicated region
    $region46: #{tpu_custom_call.1} parent=1 // pred_check
      _
    $region47: #{tpu_custom_call.1} parent=1 // pred_check_branch
      %769 = sbr.rel (0) target = $region49
    $region48: #{tpu_custom_call.1} parent=1 // pred_region
      %s771 = ssub.s32 128, 128
      %772 = vsyncadd [#allocation4], %s771
      %s774 = sshll.u32 [#allocation11], 4
      %s775 = int_to_ptr.vmem [resolvable:$true] %s774
      %777 = dma.vmem_to_hbm [thread:$0]  %s775, 128, %s6, [#allocation4]
    $region49: #{tpu_custom_call.1} parent=1 // pred_fallthru
      _
    // Predicated region
    $region50: #{tpu_custom_call.1} parent=1 // pred_check
      _
    $region51: #{tpu_custom_call.1} parent=1 // pred_check_branch
      %779 = sbr.rel (0) target = $region53
    $region52: #{tpu_custom_call.1} parent=1 // pred_region
      %780 = dma.done [#allocation4], 128
    $region53: #{tpu_custom_call.1} parent=1 // pred_fallthru
      _
    %781 = vsyncpa [#allocation3], 1
    %782 = vsyncpa [#allocation6], 1
    %783 = vsyncpa [#allocation9], 1
    %784 = vsyncpa [#allocation4], 1

</llo_original>
